<compile_context>
chip_gen: v6e
topology: v6e:2x2x1
jax: 0.10.0
libtpu: 0.0.40
codegen_flags: <defaults>
</compile_context>

<pallas_src>
import functools

import jax
import jax.numpy as jnp
from jax.experimental import pallas as pl
from jax.experimental.pallas import tpu as pltpu


def _round_up(x: int, m: int) -> int:
    return ((x + m - 1) // m) * m


def _vmem_capacity_bytes() -> int:
    try:
        return int(pltpu.get_tpu_info().vmem_capacity_bytes)
    except Exception:
        return 64 << 20  # conservative (v7x per-TC) fallback


def bert_intermediate_kernel(x_ref, w_ref, b_ref, o_ref, *, compute_dtype,
                             approximate_gelu):
    # x_ref: (tm, H) native dtype; w_ref: (H, tn) (ideally pre-cast bf16)
    # b_ref: (1, tn) f32;          o_ref: (tm, tn) out dtype
    x = x_ref[...].astype(compute_dtype)   # per-tile cast: VPU filler under MXU
    w = w_ref[...].astype(compute_dtype)   # no-op when caller pre-cast the weight
    y = jnp.dot(x, w, preferred_element_type=jnp.float32)   # MXU, f32 accumulate
    y = y + b_ref[...]                      # f32 bias, broadcast over rows
    # tanh GELU -> EUP slot (exact erf would saturate the vector-ALU slot).
    y = jax.nn.gelu(y, approximate=approximate_gelu)
    o_ref[...] = y.astype(o_ref.dtype)


def bert_intermediate(hidden_states, weight, bias, *, tm=None, tn=None,
                      compute_dtype=jnp.bfloat16, out_dtype=None,
                      approximate_gelu=True, single_buffer_params=True):
    """hidden_states: [B, S, H]; weight: [H, I]; bias: [I] -> [B, S, I].

    For best performance pre-cast `weight` to `compute_dtype` once, outside
    jit; activations are cast per-tile inside the kernel.
    """
    B, S, H = hidden_states.shape
    Hw, I = weight.shape
    assert H == Hw
    M = B * S
    if out_dtype is None:
        out_dtype = hidden_states.dtype

    x_bpe = jnp.dtype(hidden_states.dtype).itemsize
    w_bpe = jnp.dtype(weight.dtype).itemsize
    c_bpe = jnp.dtype(compute_dtype).itemsize
    o_bpe = jnp.dtype(out_dtype).itemsize
    n_param_bufs = 1 if single_buffer_params else 2

    # ---- Generation-aware tile selection (budget <= ~70% of physical VMEM) ----
    vmem_cap = _vmem_capacity_bytes()
    cap = int(0.70 * vmem_cap)

    def budget(tm_, tn_):
        return (n_param_bufs * H * tn_ * w_bpe   # weight slab
                + n_param_bufs * tn_ * 4         # bias slab (f32)
                + 2 * tm_ * H * x_bpe            # activation tiles (double-buffered)
                + tm_ * H * c_bpe                # in-kernel compute-dtype x copy
                + 2 * tm_ * tn_ * o_bpe          # output tiles (double-buffered)
                + 3 * tm_ * tn_ * 4)             # f32 matmul result + GELU temporaries

    # tm candidates, padded to a multiple of 16 (bf16 packs 2 rows / sublane).
    if tm is not None:
        tm_small = tm_large = min(tm, _round_up(M, 16))
    else:
        tm_small = min(256, _round_up(M, 16))
        tm_large = min(512, _round_up(M, 16))

    # tn: largest value that divides I, is lane-aligned, and fits the budget.
    if tn is None:
        cands = sorted({I} | {t for t in range(128, I, 128) if I % t == 0},
                       reverse=True)
        tn = next((t for t in cands if budget(tm_small, t) <= cap), cands[-1])
    assert I % tn == 0 and (tn == I or tn % 128 == 0), \
        "tn must divide I and be lane-aligned (multiple of 128) or equal I"

    tm = tm_large if budget(tm_large, tn) <= cap else tm_small
    vmem_limit = int(min(max(budget(tm, tn) * 1.25 + (4 << 20), 32 << 20),
                         vmem_cap))

    # ---- Pad M to a tile multiple.  Padded rows compute GELU(bias) and are
    # sliced off below -- numerically harmless, never read by callers. --------
    M_pad = _round_up(M, tm)
    x2d = hidden_states.reshape(M, H)
    if M_pad != M:
        x2d = jnp.pad(x2d, ((0, M_pad - M), (0, 0)))
    b2d = bias.reshape(1, I).astype(jnp.float32)

    n_blocks = I // tn
    m_blocks = M_pad // tm

    if single_buffer_params:
        def param_spec(shape, imap):
            # Block index changes only on the (slow) N axis -> one buffer.
            return pl.BlockSpec(shape, imap, pipeline_mode=pl.Buffered(1))
    else:
        def param_spec(shape, imap):
            return pl.BlockSpec(shape, imap)

    if n_blocks == 1:
        # Weight fully resident in VMEM: 1-D grid over M.  M is the parallel
        # axis, so a dual-TC chip (v7x) shards M and only duplicates the small
        # H*I weight read.
        grid = (m_blocks,)
        dim_sems = ("parallel",)
        in_specs = [
            pl.BlockSpec((tm, H), lambda i: (i, 0)),
            param_spec((H, I), lambda i: (0, 0)),
            param_spec((1, I), lambda i: (0, 0)),
        ]
        out_spec = pl.BlockSpec((tm, I), lambda i: (i, 0))
    else:
        # Streamed weight slabs: N outermost so each (H, tn) slab is loaded
        # once and reused across the whole M sweep; M (inner) is the parallel
        # axis so dual-TC sharding splits M, not N.
        grid = (n_blocks, m_blocks)
        dim_sems = ("arbitrary", "parallel")
        in_specs = [
            pl.BlockSpec((tm, H), lambda j, i: (i, 0)),
            param_spec((H, tn), lambda j, i: (0, j)),
            param_spec((1, tn), lambda j, i: (0, j)),
        ]
        out_spec = pl.BlockSpec((tm, tn), lambda j, i: (i, j))

    cost = pl.CostEstimate(
        flops=2 * M * H * I,
        transcendentals=M * I,
        bytes_accessed=(n_blocks * M_pad * H * x_bpe + H * I * w_bpe
                        + I * 4 + M_pad * I * o_bpe))

    kernel = functools.partial(bert_intermediate_kernel,
                               compute_dtype=compute_dtype,
                               approximate_gelu=approximate_gelu)

    out = pl.pallas_call(
        kernel,
        out_shape=jax.ShapeDtypeStruct((M_pad, I), out_dtype),
        grid_spec=pltpu.PrefetchScalarGridSpec(
            num_scalar_prefetch=0,
            grid=grid,
            in_specs=in_specs,
            out_specs=out_spec,
        ),
        compiler_params=pltpu.CompilerParams(
            dimension_semantics=dim_sems,
            vmem_limit_bytes=vmem_limit,
        ),
        cost_estimate=cost,
    )(x2d, weight, b2d)

    if M_pad != M:
        out = out[:M]
    return out.reshape(B, S, I)


if __name__ == "__main__":
    # Small synthetic config: hidden_dim=32, intermediate_size=128.
    batch, seq, hidden_dim, intermediate_size = 2, 8, 32, 128

    key = jax.random.PRNGKey(0)
    k_x, k_w, k_b = jax.random.split(key, 3)

    x = jax.random.normal(k_x, (batch, seq, hidden_dim), dtype=jnp.float32)
    # Deterministic parameter init (roughly like nn.Linear's uniform init).
    bound = 1.0 / (hidden_dim ** 0.5)
    w = jax.random.uniform(k_w, (hidden_dim, intermediate_size),
                           minval=-bound, maxval=bound, dtype=jnp.float32)
    b = jax.random.uniform(k_b, (intermediate_size,),
                           minval=-bound, maxval=bound, dtype=jnp.float32)

    # Pre-cast the weight to the compute dtype ONCE, outside jit (removes the
    # per-call HBM cast pass); activations stay f32 and are cast per-tile
    # inside the kernel.
    w_bf16 = w.astype(jnp.bfloat16)

    run = jax.jit(bert_intermediate)
    try:
        out = jax.block_until_ready(run(x, w_bf16, b))
    except Exception:
        # pl.Buffered(1) (single-buffered weight/bias) is a newer knob; fall
        # back to default double-buffering if this JAX build rejects it.
        run = jax.jit(functools.partial(bert_intermediate,
                                        single_buffer_params=False))
        out = jax.block_until_ready(run(x, w_bf16, b))

    assert out.shape == (batch, seq, intermediate_size)
    assert out.dtype == x.dtype

    # Reference 1: mirror the kernel's compute path (bf16 matmul, f32 acc,
    # f32 bias, tanh GELU).
    ref_bf16 = jax.nn.gelu(
        jnp.dot(x.reshape(-1, hidden_dim).astype(jnp.bfloat16), w_bf16,
                preferred_element_type=jnp.float32) + b,
        approximate=True,
    ).astype(x.dtype).reshape(batch, seq, intermediate_size)
    assert jnp.allclose(out, ref_bf16, atol=1e-4, rtol=1e-4)

    # Reference 2: full-f32, exact-erf GELU reference; loose tolerance (bf16
    # matmul and tanh GELU are deliberate numerics changes per the perf review).
    ref_f32 = jax.nn.gelu(x @ w + b, approximate=False)
    assert jnp.allclose(out, ref_f32, atol=3e-2, rtol=3e-2)

    print("KERNEL_OK")
</pallas_src>

<mosaic_0001>
module attributes {stable_mosaic.version = 11 : i64} {
  func.func @bert_intermediate_kernel(%arg0: i32, %arg1: memref<16x32xf32, #tpu.memory_space<vmem>>, %arg2: memref<32x128xbf16, #tpu.memory_space<vmem>>, %arg3: memref<1x128xf32, #tpu.memory_space<vmem>>, %arg4: memref<16x128xf32, #tpu.memory_space<vmem>>) attributes {dimension_semantics = [#tpu.dimension_semantics<parallel>], iteration_bounds = array<i64: 1>, scalar_prefetch = 0 : i64, scratch_operands = 0 : i64, tpu.core_type = #tpu.core_type<tc>, window_params = [{transform_indices = @transform_0, window_bounds = array<i64: 16, 32>}, {pipeline_mode = #tpu.pipeline_mode<synchronous>, transform_indices = @transform_1, window_bounds = array<i64: 32, 128>}, {pipeline_mode = #tpu.pipeline_mode<synchronous>, transform_indices = @transform_2, window_bounds = array<i64: 1, 128>}, {transform_indices = @transform_3, window_bounds = array<i64: 16, 128>}]} {
    %c0 = arith.constant 0 : index
    %c0_0 = arith.constant 0 : index
    %0 = vector.load %arg1[%c0, %c0_0] : memref<16x32xf32, #tpu.memory_space<vmem>>, vector<16x32xf32>
    %1 = arith.truncf %0 : vector<16x32xf32> to vector<16x32xbf16>
    %c0_1 = arith.constant 0 : index
    %c0_2 = arith.constant 0 : index
    %2 = vector.load %arg2[%c0_1, %c0_2] : memref<32x128xbf16, #tpu.memory_space<vmem>>, vector<32x128xbf16>
    %cst = arith.constant dense<0.000000e+00> : vector<16x128xf32>
    %3 = tpu.matmul %1, %2, %cst {dimension_numbers = #tpu.dot_dimension_numbers<[1], [0], [0], [1], [0, 0, 1, 1], [], []>} : vector<16x32xbf16>, vector<32x128xbf16>, vector<16x128xf32> -> vector<16x128xf32>
    %c0_3 = arith.constant 0 : index
    %c0_4 = arith.constant 0 : index
    %4 = vector.load %arg3[%c0_3, %c0_4] : memref<1x128xf32, #tpu.memory_space<vmem>>, vector<1x128xf32>
    %5 = vector.broadcast %4 : vector<1x128xf32> to vector<16x128xf32>
    %6 = arith.addf %3, %5 : vector<16x128xf32>
    %7 = arith.mulf %6, %6 : vector<16x128xf32>
    %8 = arith.mulf %6, %7 : vector<16x128xf32>
    %cst_5 = arith.constant 4.471500e-02 : f32
    %9 = vector.broadcast %cst_5 : f32 to vector<16x128xf32>
    %10 = arith.mulf %9, %8 : vector<16x128xf32>
    %11 = arith.addf %6, %10 : vector<16x128xf32>
    %cst_6 = arith.constant 0.797884583 : f32
    %12 = vector.broadcast %cst_6 : f32 to vector<16x128xf32>
    %13 = arith.mulf %12, %11 : vector<16x128xf32>
    %14 = math.tanh %13 : vector<16x128xf32>
    %cst_7 = arith.constant 1.000000e+00 : f32
    %15 = vector.broadcast %cst_7 : f32 to vector<16x128xf32>
    %16 = arith.addf %15, %14 : vector<16x128xf32>
    %cst_8 = arith.constant 5.000000e-01 : f32
    %17 = vector.broadcast %cst_8 : f32 to vector<16x128xf32>
    %18 = arith.mulf %17, %16 : vector<16x128xf32>
    %19 = arith.mulf %6, %18 : vector<16x128xf32>
    %c0_9 = arith.constant 0 : index
    %c0_10 = arith.constant 0 : index
    %20 = vector.load %arg4[%c0_9, %c0_10] : memref<16x128xf32, #tpu.memory_space<vmem>>, vector<16x128xf32>
    tpu.vector_store %arg4[%c0_9, %c0_10], %19 {strides = array<i32>} : memref<16x128xf32, #tpu.memory_space<vmem>>, vector<16x128xf32>,
    return
  }
  func.func @transform_0(%arg0: i32) -> (i32, i32) {
    %c0_i32 = arith.constant 0 : i32
    %c0_i32_0 = arith.constant 0 : i32
    return %arg0, %c0_i32 : i32, i32
  }
  func.func @transform_1(%arg0: i32) -> (i32, i32) {
    %c0_i32 = arith.constant 0 : i32
    %c0_i32_0 = arith.constant 0 : i32
    %c0_i32_1 = arith.constant 0 : i32
    return %c0_i32, %c0_i32_0 : i32, i32
  }
  func.func @transform_2(%arg0: i32) -> (i32, i32) {
    %c0_i32 = arith.constant 0 : i32
    %c0_i32_0 = arith.constant 0 : i32
    %c0_i32_1 = arith.constant 0 : i32
    return %c0_i32, %c0_i32_0 : i32, i32
  }
  func.func @transform_3(%arg0: i32) -> (i32, i32) {
    %c0_i32 = arith.constant 0 : i32
    %c0_i32_0 = arith.constant 0 : i32
    return %arg0, %c0_i32 : i32, i32
  }
}

module attributes {stable_mosaic.version = 11 : i64} {
  func.func @bert_intermediate_kernel(%arg0: i32, %arg1: memref<16x32xf32, #tpu.memory_space<vmem>>, %arg2: memref<32x128xbf16, #tpu.memory_space<vmem>>, %arg3: memref<1x128xf32, #tpu.memory_space<vmem>>, %arg4: memref<16x128xf32, #tpu.memory_space<vmem>>) attributes {dimension_semantics = [#tpu.dimension_semantics<parallel>], iteration_bounds = array<i64: 1>, scalar_prefetch = 0 : i64, scratch_operands = 0 : i64, tpu.core_type = #tpu.core_type<tc>, window_params = [{transform_indices = @transform_0, window_bounds = array<i64: 16, 32>}, {pipeline_mode = #tpu.pipeline_mode<synchronous>, transform_indices = @transform_1, window_bounds = array<i64: 32, 128>}, {pipeline_mode = #tpu.pipeline_mode<synchronous>, transform_indices = @transform_2, window_bounds = array<i64: 1, 128>}, {transform_indices = @transform_3, window_bounds = array<i64: 16, 128>}]} {
    %c0 = arith.constant 0 : index
    %c0_0 = arith.constant 0 : index
    %0 = vector.load %arg1[%c0, %c0_0] : memref<16x32xf32, #tpu.memory_space<vmem>>, vector<16x32xf32>
    %1 = arith.truncf %0 : vector<16x32xf32> to vector<16x32xbf16>
    %c0_1 = arith.constant 0 : index
    %c0_2 = arith.constant 0 : index
    %2 = vector.load %arg2[%c0_1, %c0_2] : memref<32x128xbf16, #tpu.memory_space<vmem>>, vector<32x128xbf16>
    %cst = arith.constant dense<0.000000e+00> : vector<16x128xf32>
    %3 = tpu.matmul %1, %2, %cst {dimension_numbers = #tpu.dot_dimension_numbers<[1], [0], [0], [1], [0, 0, 1, 1], [], []>} : vector<16x32xbf16>, vector<32x128xbf16>, vector<16x128xf32> -> vector<16x128xf32>
    %c0_3 = arith.constant 0 : index
    %c0_4 = arith.constant 0 : index
    %4 = vector.load %arg3[%c0_3, %c0_4] : memref<1x128xf32, #tpu.memory_space<vmem>>, vector<1x128xf32>
    %5 = vector.broadcast %4 : vector<1x128xf32> to vector<16x128xf32>
    %6 = arith.addf %3, %5 : vector<16x128xf32>
    %7 = arith.mulf %6, %6 : vector<16x128xf32>
    %8 = arith.mulf %6, %7 : vector<16x128xf32>
    %cst_5 = arith.constant 4.471500e-02 : f32
    %9 = vector.broadcast %cst_5 : f32 to vector<16x128xf32>
    %10 = arith.mulf %9, %8 : vector<16x128xf32>
    %11 = arith.addf %6, %10 : vector<16x128xf32>
    %cst_6 = arith.constant 0.797884583 : f32
    %12 = vector.broadcast %cst_6 : f32 to vector<16x128xf32>
    %13 = arith.mulf %12, %11 : vector<16x128xf32>
    %14 = math.tanh %13 : vector<16x128xf32>
    %cst_7 = arith.constant 1.000000e+00 : f32
    %15 = vector.broadcast %cst_7 : f32 to vector<16x128xf32>
    %16 = arith.addf %15, %14 : vector<16x128xf32>
    %cst_8 = arith.constant 5.000000e-01 : f32
    %17 = vector.broadcast %cst_8 : f32 to vector<16x128xf32>
    %18 = arith.mulf %17, %16 : vector<16x128xf32>
    %19 = arith.mulf %6, %18 : vector<16x128xf32>
    %c0_9 = arith.constant 0 : index
    %c0_10 = arith.constant 0 : index
    %20 = vector.load %arg4[%c0_9, %c0_10] : memref<16x128xf32, #tpu.memory_space<vmem>>, vector<16x128xf32>
    tpu.vector_store %arg4[%c0_9, %c0_10], %19 {strides = array<i32>} : memref<16x128xf32, #tpu.memory_space<vmem>>, vector<16x128xf32>,
    return
  }
  func.func @transform_0(%arg0: i32) -> (i32, i32) {
    %c0_i32 = arith.constant 0 : i32
    %c0_i32_0 = arith.constant 0 : i32
    return %arg0, %c0_i32 : i32, i32
  }
  func.func @transform_1(%arg0: i32) -> (i32, i32) {
    %c0_i32 = arith.constant 0 : i32
    %c0_i32_0 = arith.constant 0 : i32
    %c0_i32_1 = arith.constant 0 : i32
    return %c0_i32, %c0_i32_0 : i32, i32
  }
  func.func @transform_2(%arg0: i32) -> (i32, i32) {
    %c0_i32 = arith.constant 0 : i32
    %c0_i32_0 = arith.constant 0 : i32
    %c0_i32_1 = arith.constant 0 : i32
    return %c0_i32, %c0_i32_0 : i32, i32
  }
  func.func @transform_3(%arg0: i32) -> (i32, i32) {
    %c0_i32 = arith.constant 0 : i32
    %c0_i32_0 = arith.constant 0 : i32
    return %arg0, %c0_i32 : i32, i32
  }
}

</mosaic_0001>

<llo_original>
// kernel: bert_intermediate.1
$region0: #{bert_intermediate.1}
  #allocation0 [shape = 'u32[]', space=smem, size = 0x4, offset = 0x4, fixed_abs, tag = 'smem constant byte address 0x4 - core index']
  #allocation1 [shape = 'u32[144,128]{1,0:T(1,128)}', space=vmem, size = 0x12000, scoped, tag = 'internal scratch']
  %s0 = inlined_call_operand.hbm [shape: f32[16,32], index: 0, kind: input, shape index: {}]
  %s1 = inlined_call_operand.hbm [shape: bf16[32,128], index: 1, kind: input, shape index: {}]
  %s2 = inlined_call_operand.vmem [shape: f32[1,128], index: 2, kind: input, shape index: {}]
  %s3 = inlined_call_operand.hbm [shape: f32[16,128], index: 3, kind: output, shape index: {}]
  %s4 = sld [smem:[#allocation0]]
  $region30: #{bert_intermediate.1} parent=0
    _
  %s6 = ssub.s32 1, %s4
  %s7 = scalar_select 0, %s6, %s4
  $region1: #{bert_intermediate.1} parent=0
    #allocation2 [shape = 'u8[8192]{0}', space=vmem, size = 0x2000, scoped, tag = 'input window, operand 0, single buffered']
    #allocation3 [shape = 's32[1]{0}', space=sflag, size = 0x4, scoped, tag = 'scoped memory for bert_intermediate.1']
    #allocation4 [shape = 's32[1]{0}', space=sflag, size = 0x4, scoped, tag = 'scoped memory for bert_intermediate.1']
    #allocation5 [shape = 'u8[8192]{0}', space=vmem, size = 0x2000, scoped, tag = 'input window, operand 1, single buffered']
    #allocation6 [shape = 's32[1]{0}', space=sflag, size = 0x4, scoped, tag = 'scoped memory for bert_intermediate.1']
    #allocation7 [shape = 'u8[8192]{0}', space=vmem, size = 0x2000, scoped, tag = 'output window, operand 0, single buffered']
    %8 = vsyncpa [#allocation3], 0
    %9 = vsyncpa [#allocation6], 0
    %10 = vsyncpa [#allocation4], 0
    // Predicated region
    $region2: #{bert_intermediate.1} parent=1 // pred_check
      _
    $region3: #{bert_intermediate.1} parent=1 // pred_check_branch
      %12 = sbr.rel (0) target = $region5
    $region4: #{bert_intermediate.1} parent=1 // pred_region
      %s14 = ssub.s32 256, 256
      %15 = vsyncadd [#allocation3], %s14
      %s16 = sshll.u32 [#allocation2], 4
      %s17 = int_to_ptr.vmem [resolvable:$true] %s16
      %22 = dma.hbm_to_vmem [thread:$0]  %s0, 256, %s17, [#allocation3], 128, 128, 8
    $region5: #{bert_intermediate.1} parent=1 // pred_fallthru
      _
    // Predicated region
    $region6: #{bert_intermediate.1} parent=1 // pred_check
      _
    $region7: #{bert_intermediate.1} parent=1 // pred_check_branch
      %24 = sbr.rel (0) target = $region9
    $region8: #{bert_intermediate.1} parent=1 // pred_region
      %s26 = ssub.s32 256, 256
      %27 = vsyncadd [#allocation6], %s26
      %s28 = sshll.u32 [#allocation5], 4
      %s29 = int_to_ptr.vmem [resolvable:$true] %s28
      %34 = dma.hbm_to_vmem [thread:$0]  %s1, 256, %s29, [#allocation6], 64, 64, 4
    $region9: #{bert_intermediate.1} parent=1 // pred_fallthru
      _
    // Predicated region
    $region10: #{bert_intermediate.1} parent=1 // pred_check
      _
    $region11: #{bert_intermediate.1} parent=1 // pred_check_branch
      %36 = sbr.rel (0) target = $region13
    $region12: #{bert_intermediate.1} parent=1 // pred_region
      _
    $region13: #{bert_intermediate.1} parent=1 // pred_fallthru
      _
    // Predicated region
    $region14: #{bert_intermediate.1} parent=1 // pred_check
      _
    $region15: #{bert_intermediate.1} parent=1 // pred_check_branch
      %38 = sbr.rel (0) target = $region17
    $region16: #{bert_intermediate.1} parent=1 // pred_region
      %39 = dma.done [#allocation3], 256
    $region17: #{bert_intermediate.1} parent=1 // pred_fallthru
      _
    // Predicated region
    $region18: #{bert_intermediate.1} parent=1 // pred_check
      _
    $region19: #{bert_intermediate.1} parent=1 // pred_check_branch
      %41 = sbr.rel (0) target = $region21
    $region20: #{bert_intermediate.1} parent=1 // pred_region
      %42 = dma.done [#allocation6], 256
    $region21: #{bert_intermediate.1} parent=1 // pred_fallthru
      _
    %v44 = vld [vmem:[#allocation2] sm:$0xff]
    %v45 = vld [vmem:[#allocation2 + $0x8] sm:$0xff]
    %v46 = vpack.c.bf16 %v45, %v44
    %v47 = vld [vmem:[#allocation5] sm:$0xf]
    %v48 = vld [vmem:[#allocation5 + $0x4] sm:$0xf]
    %v49 = vld [vmem:[#allocation5 + $0x8] sm:$0xf]
    %v50 = vld [vmem:[#allocation5 + $0xc] sm:$0xf]
    %v51 = vld [vmem:[%s2] sm:$0x1]
    %v53 = vlaneseq
    %v54 = vshrl.u32 %v53, 7
    %v55 = vsub.s32 0, %v54
    %v56 = vrot.slane %v51, %v55
    %v62 = vunpack.c.l.b16 %v47
    %v63 = vunpack.c.l.b16 %v48
    %v64 = vunpack.c.l.b16 %v49
    %v65 = vunpack.c.l.b16 %v50
    %v66 = vpack.c.b16 %v63, %v62
    %v67 = vpack.c.b16 %v65, %v64
    %vm70 = vcmask 261120
    %v72 = vsel %vm70, %v46, 0
    %74 = vmatprep.subr.bf16.mxu0 0
    %75 = vmatpush1.bf16.msra.mxu0 0
    %76 = vmatprep.subr.bf16.mxu0 0
    %77 = vmatpush1.bf16.msra.mxu0 0
    %78 = vmatprep.subr.bf16.mxu0 0
    %79 = vmatpush1.bf16.msra.mxu0 0
    %80 = vmatprep.subr.bf16.mxu0 0
    %81 = vmatpush1.bf16.msra.mxu0 0
    %82 = vmatprep.subr.bf16.mxu0 0
    %83 = vmatpush1.bf16.msra.mxu0 0
    %84 = vmatprep.subr.bf16.mxu0 0
    %85 = vmatpush1.bf16.msra.mxu0 0
    %86 = vmatprep.subr.bf16.mxu0 0
    %87 = vmatpush1.bf16.msra.mxu0 %v67
    %88 = vmatprep.subr.bf16.mxu0 0
    %89 = vmatpush1.bf16.msra.mxu0 %v66
    %90 = vmatprep.subr.bf16.mxu0 0
    %91 = vmatpush2.bf16.msra.mxu0 0
    %92 = vmatprep.subr.bf16.mxu0 0
    %93 = vmatpush2.bf16.msra.mxu0 0
    %94 = vmatprep.subr.bf16.mxu0 0
    %95 = vmatpush2.bf16.msra.mxu0 0
    %96 = vmatprep.subr.bf16.mxu0 0
    %97 = vmatpush2.bf16.msra.mxu0 0
    %98 = vmatprep.subr.bf16.mxu0 0
    %99 = vmatpush2.bf16.msra.mxu0 0
    %100 = vmatprep.subr.bf16.mxu0 0
    %101 = vmatpush2.bf16.msra.mxu0 0
    %102 = vmatprep.subr.bf16.mxu0 0
    %103 = vmatpush2.bf16.msra.mxu0 0
    %104 = vmatprep.subr.bf16.mxu0 0
    %105 = vmatpush2.bf16.msra.mxu0 0
    %106 = vmatprep.mubr.bf16.mxu0 0
    %107 = vmatmul.mubr.bf16.gmra.mxu0 %v72
    %v108 = vpop.f32.mrf.mxu0
    %v109 = vadd.f32 %v56, %v108
    %v110 = vpop.f32.mrf.mxu0
    %v111 = vpop.f32.mrf.mxu0
    %v112 = vadd.f32 %v56, %v111
    %v113 = vpop.f32.mrf.mxu0
    %114 = vdwg.mxu0
    %v115 = vmul.f32 %v109, %v109
    %v116 = vmul.f32 %v112, %v112
    %v117 = vmul.f32 %v109, %v115
    %v118 = vmul.f32 %v112, %v116
    %v119 = vmul.f32 %v117, 0.044715
    %v120 = vmul.f32 %v118, 0.044715
    %v121 = vadd.f32 %v109, %v119
    %v122 = vadd.f32 %v112, %v120
    %v123 = vmul.f32 %v121, 0.7978846
    %v124 = vmul.f32 %v122, 0.7978846
    %v125 = vtanh.pop %v123
    %v126 = vtanh.pop %v124
    %v127 = vadd.f32 %v125, 1.0
    %v128 = vadd.f32 %v126, 1.0
    %v129 = vmul.f32 %v127, 0.5
    %v130 = vmul.f32 %v128, 0.5
    %v131 = vmul.f32 %v109, %v129
    %v132 = vmul.f32 %v112, %v130
    %133 = vst [vmem:[#allocation7] sm:$0xff] %v131
    %134 = vst [vmem:[#allocation7 + $0x8] sm:$0xff] %v132
    // Predicated region
    $region22: #{bert_intermediate.1} parent=1 // pred_check
      _
    $region23: #{bert_intermediate.1} parent=1 // pred_check_branch
      %136 = sbr.rel (0) target = $region25
    $region24: #{bert_intermediate.1} parent=1 // pred_region
      %s138 = ssub.s32 256, 256
      %139 = vsyncadd [#allocation4], %s138
      %s140 = sshll.u32 [#allocation7], 4
      %s141 = int_to_ptr.vmem [resolvable:$true] %s140
      %146 = dma.vmem_to_hbm [thread:$0]  %s141, 256, %s3, [#allocation4], 128, 128, 8
    $region25: #{bert_intermediate.1} parent=1 // pred_fallthru
      _
    // Predicated region
    $region26: #{bert_intermediate.1} parent=1 // pred_check
      _
    $region27: #{bert_intermediate.1} parent=1 // pred_check_branch
      %148 = sbr.rel (0) target = $region29
    $region28: #{bert_intermediate.1} parent=1 // pred_region
      %149 = dma.done [#allocation4], 256
    $region29: #{bert_intermediate.1} parent=1 // pred_fallthru
      _
    %150 = vsyncpa [#allocation3], 1
    %151 = vsyncpa [#allocation6], 1
    %152 = vsyncpa [#allocation4], 1

// kernel: bert_intermediate.1
$region0: #{bert_intermediate.1}
  #allocation0 [shape = 'u32[]', space=smem, size = 0x4, offset = 0x4, fixed_abs, tag = 'smem constant byte address 0x4 - core index']
  #allocation1 [shape = 'u32[144,128]{1,0:T(1,128)}', space=vmem, size = 0x12000, scoped, tag = 'internal scratch']
  %s0 = inlined_call_operand.hbm [shape: f32[16,32], index: 0, kind: input, shape index: {}]
  %s1 = inlined_call_operand.hbm [shape: bf16[32,128], index: 1, kind: input, shape index: {}]
  %s2 = inlined_call_operand.vmem [shape: f32[1,128], index: 2, kind: input, shape index: {}]
  %s3 = inlined_call_operand.hbm [shape: f32[16,128], index: 3, kind: output, shape index: {}]
  %s4 = sld [smem:[#allocation0]]
  $region30: #{bert_intermediate.1} parent=0
    _
  %s6 = ssub.s32 1, %s4
  %s7 = scalar_select 0, %s6, %s4
  $region1: #{bert_intermediate.1} parent=0
    #allocation2 [shape = 'u8[8192]{0}', space=vmem, size = 0x2000, scoped, tag = 'input window, operand 0, single buffered']
    #allocation3 [shape = 's32[1]{0}', space=sflag, size = 0x4, scoped, tag = 'scoped memory for bert_intermediate.1']
    #allocation4 [shape = 's32[1]{0}', space=sflag, size = 0x4, scoped, tag = 'scoped memory for bert_intermediate.1']
    #allocation5 [shape = 'u8[8192]{0}', space=vmem, size = 0x2000, scoped, tag = 'input window, operand 1, single buffered']
    #allocation6 [shape = 's32[1]{0}', space=sflag, size = 0x4, scoped, tag = 'scoped memory for bert_intermediate.1']
    #allocation7 [shape = 'u8[8192]{0}', space=vmem, size = 0x2000, scoped, tag = 'output window, operand 0, single buffered']
    %8 = vsyncpa [#allocation3], 0
    %9 = vsyncpa [#allocation6], 0
    %10 = vsyncpa [#allocation4], 0
    // Predicated region
    $region2: #{bert_intermediate.1} parent=1 // pred_check
      _
    $region3: #{bert_intermediate.1} parent=1 // pred_check_branch
      %12 = sbr.rel (0) target = $region5
    $region4: #{bert_intermediate.1} parent=1 // pred_region
      %s14 = ssub.s32 256, 256
      %15 = vsyncadd [#allocation3], %s14
      %s16 = sshll.u32 [#allocation2], 4
      %s17 = int_to_ptr.vmem [resolvable:$true] %s16
      %22 = dma.hbm_to_vmem [thread:$0]  %s0, 256, %s17, [#allocation3], 128, 128, 8
    $region5: #{bert_intermediate.1} parent=1 // pred_fallthru
      _
    // Predicated region
    $region6: #{bert_intermediate.1} parent=1 // pred_check
      _
    $region7: #{bert_intermediate.1} parent=1 // pred_check_branch
      %24 = sbr.rel (0) target = $region9
    $region8: #{bert_intermediate.1} parent=1 // pred_region
      %s26 = ssub.s32 256, 256
      %27 = vsyncadd [#allocation6], %s26
      %s28 = sshll.u32 [#allocation5], 4
      %s29 = int_to_ptr.vmem [resolvable:$true] %s28
      %34 = dma.hbm_to_vmem [thread:$0]  %s1, 256, %s29, [#allocation6], 64, 64, 4
    $region9: #{bert_intermediate.1} parent=1 // pred_fallthru
      _
    // Predicated region
    $region10: #{bert_intermediate.1} parent=1 // pred_check
      _
    $region11: #{bert_intermediate.1} parent=1 // pred_check_branch
      %36 = sbr.rel (0) target = $region13
    $region12: #{bert_intermediate.1} parent=1 // pred_region
      _
    $region13: #{bert_intermediate.1} parent=1 // pred_fallthru
      _
    // Predicated region
    $region14: #{bert_intermediate.1} parent=1 // pred_check
      _
    $region15: #{bert_intermediate.1} parent=1 // pred_check_branch
      %38 = sbr.rel (0) target = $region17
    $region16: #{bert_intermediate.1} parent=1 // pred_region
      %39 = dma.done [#allocation3], 256
    $region17: #{bert_intermediate.1} parent=1 // pred_fallthru
      _
    // Predicated region
    $region18: #{bert_intermediate.1} parent=1 // pred_check
      _
    $region19: #{bert_intermediate.1} parent=1 // pred_check_branch
      %41 = sbr.rel (0) target = $region21
    $region20: #{bert_intermediate.1} parent=1 // pred_region
      %42 = dma.done [#allocation6], 256
    $region21: #{bert_intermediate.1} parent=1 // pred_fallthru
      _
    %v44 = vld [vmem:[#allocation2] sm:$0xff]
    %v45 = vld [vmem:[#allocation2 + $0x8] sm:$0xff]
    %v46 = vpack.c.bf16 %v45, %v44
    %v47 = vld [vmem:[#allocation5] sm:$0xf]
    %v48 = vld [vmem:[#allocation5 + $0x4] sm:$0xf]
    %v49 = vld [vmem:[#allocation5 + $0x8] sm:$0xf]
    %v50 = vld [vmem:[#allocation5 + $0xc] sm:$0xf]
    %v51 = vld [vmem:[%s2] sm:$0x1]
    %v53 = vlaneseq
    %v54 = vshrl.u32 %v53, 7
    %v55 = vsub.s32 0, %v54
    %v56 = vrot.slane %v51, %v55
    %v62 = vunpack.c.l.b16 %v47
    %v63 = vunpack.c.l.b16 %v48
    %v64 = vunpack.c.l.b16 %v49
    %v65 = vunpack.c.l.b16 %v50
    %v66 = vpack.c.b16 %v63, %v62
    %v67 = vpack.c.b16 %v65, %v64
    %vm70 = vcmask 261120
    %v72 = vsel %vm70, %v46, 0
    %74 = vmatprep.subr.bf16.mxu0 0
    %75 = vmatpush1.bf16.msra.mxu0 0
    %76 = vmatprep.subr.bf16.mxu0 0
    %77 = vmatpush1.bf16.msra.mxu0 0
    %78 = vmatprep.subr.bf16.mxu0 0
    %79 = vmatpush1.bf16.msra.mxu0 0
    %80 = vmatprep.subr.bf16.mxu0 0
    %81 = vmatpush1.bf16.msra.mxu0 0
    %82 = vmatprep.subr.bf16.mxu0 0
    %83 = vmatpush1.bf16.msra.mxu0 0
    %84 = vmatprep.subr.bf16.mxu0 0
    %85 = vmatpush1.bf16.msra.mxu0 0
    %86 = vmatprep.subr.bf16.mxu0 0
    %87 = vmatpush1.bf16.msra.mxu0 %v67
    %88 = vmatprep.subr.bf16.mxu0 0
    %89 = vmatpush1.bf16.msra.mxu0 %v66
    %90 = vmatprep.subr.bf16.mxu0 0
    %91 = vmatpush2.bf16.msra.mxu0 0
    %92 = vmatprep.subr.bf16.mxu0 0
    %93 = vmatpush2.bf16.msra.mxu0 0
    %94 = vmatprep.subr.bf16.mxu0 0
    %95 = vmatpush2.bf16.msra.mxu0 0
    %96 = vmatprep.subr.bf16.mxu0 0
    %97 = vmatpush2.bf16.msra.mxu0 0
    %98 = vmatprep.subr.bf16.mxu0 0
    %99 = vmatpush2.bf16.msra.mxu0 0
    %100 = vmatprep.subr.bf16.mxu0 0
    %101 = vmatpush2.bf16.msra.mxu0 0
    %102 = vmatprep.subr.bf16.mxu0 0
    %103 = vmatpush2.bf16.msra.mxu0 0
    %104 = vmatprep.subr.bf16.mxu0 0
    %105 = vmatpush2.bf16.msra.mxu0 0
    %106 = vmatprep.mubr.bf16.mxu0 0
    %107 = vmatmul.mubr.bf16.gmra.mxu0 %v72
    %v108 = vpop.f32.mrf.mxu0
    %v109 = vadd.f32 %v56, %v108
    %v110 = vpop.f32.mrf.mxu0
    %v111 = vpop.f32.mrf.mxu0
    %v112 = vadd.f32 %v56, %v111
    %v113 = vpop.f32.mrf.mxu0
    %114 = vdwg.mxu0
    %v115 = vmul.f32 %v109, %v109
    %v116 = vmul.f32 %v112, %v112
    %v117 = vmul.f32 %v109, %v115
    %v118 = vmul.f32 %v112, %v116
    %v119 = vmul.f32 %v117, 0.044715
    %v120 = vmul.f32 %v118, 0.044715
    %v121 = vadd.f32 %v109, %v119
    %v122 = vadd.f32 %v112, %v120
    %v123 = vmul.f32 %v121, 0.7978846
    %v124 = vmul.f32 %v122, 0.7978846
    %v125 = vtanh.pop %v123
    %v126 = vtanh.pop %v124
    %v127 = vadd.f32 %v125, 1.0
    %v128 = vadd.f32 %v126, 1.0
    %v129 = vmul.f32 %v127, 0.5
    %v130 = vmul.f32 %v128, 0.5
    %v131 = vmul.f32 %v109, %v129
    %v132 = vmul.f32 %v112, %v130
    %133 = vst [vmem:[#allocation7] sm:$0xff] %v131
    %134 = vst [vmem:[#allocation7 + $0x8] sm:$0xff] %v132
    // Predicated region
    $region22: #{bert_intermediate.1} parent=1 // pred_check
      _
    $region23: #{bert_intermediate.1} parent=1 // pred_check_branch
      %136 = sbr.rel (0) target = $region25
    $region24: #{bert_intermediate.1} parent=1 // pred_region
      %s138 = ssub.s32 256, 256
      %139 = vsyncadd [#allocation4], %s138
      %s140 = sshll.u32 [#allocation7], 4
      %s141 = int_to_ptr.vmem [resolvable:$true] %s140
      %146 = dma.vmem_to_hbm [thread:$0]  %s141, 256, %s3, [#allocation4], 128, 128, 8
    $region25: #{bert_intermediate.1} parent=1 // pred_fallthru
      _
    // Predicated region
    $region26: #{bert_intermediate.1} parent=1 // pred_check
      _
    $region27: #{bert_intermediate.1} parent=1 // pred_check_branch
      %148 = sbr.rel (0) target = $region29
    $region28: #{bert_intermediate.1} parent=1 // pred_region
      %149 = dma.done [#allocation4], 256
    $region29: #{bert_intermediate.1} parent=1 // pred_fallthru
      _
    %150 = vsyncpa [#allocation3], 1
    %151 = vsyncpa [#allocation6], 1
    %152 = vsyncpa [#allocation4], 1

</llo_original>
